<compile_context>
chip_gen: v5e
topology: v5e:2x2
jax: 0.10.0
libtpu: 0.0.40
codegen_flags: <defaults>
</compile_context>

<pallas_src>
import functools

import jax
import jax.numpy as jnp
from jax import lax
from jax.experimental import pallas as pl
from jax.experimental.pallas import tpu as pltpu

BN_EPS = 1e-5


def _round_up(v, m):
    return (v + m - 1) // m * m


def _largest_divisor_leq(n, cap):
    for d in range(min(n, cap), 0, -1):
        if n % d == 0:
            return d
    return 1


def _vmem_limit_bytes():
    # Generation-aware VMEM budget: ~48 MiB on v7x (64 MiB physical), ~96 MiB on
    # v5e/v6e (128 MiB physical); safe 32 MiB fallback if the query is unavailable.
    try:
        cap = pltpu.get_tpu_info().vmem_capacity_bytes
        return int(min(0.75 * cap, 96 * 1024 * 1024))
    except Exception:
        return 32 * 1024 * 1024


def _conv_tile(x_bf, w, b, k_taps, l_tile):
    """Conv for one batch element: K accumulated MXU matmuls, no im2col copy.

    x_bf: (Nb, Cin, L_pad) bf16, w: (K, Cout, Cin) bf16 -> (Cout, l_tile) f32.
    """
    cout = w.shape[1]
    conv = jnp.zeros((cout, l_tile), jnp.float32)
    for k in range(k_taps):  # K is small & static; slice starts are static
        conv = conv + jnp.dot(w[k], x_bf[b, :, k:k + l_tile],
                              preferred_element_type=jnp.float32)
    return conv


def _stats_kernel(x_ref, w_ref, stats_ref, *, k_taps, l_out_pad, l_out):
    # x_ref:     (Nb, Cin, L_pad)  f32  (cast to bf16 in-kernel, hidden under the MXU)
    # w_ref:     (K, Cout, Cin)    bf16 (resident across the grid)
    # stats_ref: (1, Cout, 2)      f32  [sum, sum_sq]; resident accumulator across tiles
    @pl.when(pl.program_id(1) == 0)
    def _():
        stats_ref[...] = jnp.zeros_like(stats_ref)

    x_bf = x_ref[...].astype(jnp.bfloat16)
    w = w_ref[...]
    nb = x_ref.shape[0]
    cout = w.shape[1]

    mask = None
    if l_out_pad != l_out:  # padded lanes must not pollute the batch statistics
        mask = lax.broadcasted_iota(jnp.int32, (cout, l_out_pad), 1) < l_out

    psum = jnp.zeros((cout, 1), jnp.float32)
    psq = jnp.zeros((cout, 1), jnp.float32)
    for b in range(nb):
        conv = _conv_tile(x_bf, w, b, k_taps, l_out_pad)
        if mask is not None:
            conv = jnp.where(mask, conv, 0.0)
        psum = psum + jnp.sum(conv, axis=1, keepdims=True)
        psq = psq + jnp.sum(conv * conv, axis=1, keepdims=True)

    stats_ref[0] = stats_ref[0] + jnp.concatenate([psum, psq], axis=1)


def _conv_bn_relu_kernel(x_ref, w_ref, s_ref, t_ref, o_ref, *, k_taps, l_out_pad):
    # Recompute the conv and apply the folded BN affine + ReLU (mul + add + max tail).
    # x_ref: (Nb, Cin, L_pad) f32; w_ref: (K, Cout, Cin) bf16;
    # s_ref/t_ref: (Cout, 1) f32; o_ref: (Nb, Cout, L_out_pad) f32.
    x_bf = x_ref[...].astype(jnp.bfloat16)
    w = w_ref[...]
    s = s_ref[...]
    t = t_ref[...]
    nb = x_ref.shape[0]
    for b in range(nb):
        conv = _conv_tile(x_bf, w, b, k_taps, l_out_pad)
        o_ref[b] = jnp.maximum(conv * s + t, 0.0)


@jax.jit
def conv_bn_relu_1d(x_ncl, weight, bias, gamma, beta):
    """x_ncl: (N, C_in, L)   weight: (C_out, C_in, K)   bias/gamma/beta: (C_out,)

    `bias` is accepted for API parity but unused: training-mode BatchNorm makes the
    forward output independent of a per-channel constant added before it.
    """
    del bias  # cancelled exactly by the BN mean subtraction
    N, Cin, L = x_ncl.shape
    Cout, _, K = weight.shape
    L_out = L - K + 1
    assert L_out >= 1

    # Lane-dense layout: pad the conv output length up to a multiple of 128 so stores
    # are unmasked; pad the input (with zeros) accordingly. No-op when already aligned.
    L_out_pad = _round_up(L_out, 128)
    L_pad = L_out_pad + K - 1
    x_p = x_ncl.astype(jnp.float32)
    if L_pad != L:
        x_p = jnp.pad(x_p, ((0, 0), (0, 0), (0, L_pad - L)))

    # Weight relayout (tiny, once): (Cout, Cin, K) -> (K, Cout, Cin), bf16 for the MXU.
    w = jnp.transpose(weight, (2, 0, 1)).astype(jnp.bfloat16)

    # Batch tiling: Nb batch elements per grid step.
    Nb = _largest_divisor_leq(N, 8)
    n_tiles = N // Nb
    # Leading "parallel" shard axis lets v7x's two TensorCores split pass 1.
    NS = 2 if (n_tiles % 2 == 0 and n_tiles >= 2) else 1
    NT = n_tiles // NS

    vmem_limit = _vmem_limit_bytes()
    cparams_p1 = pltpu.CompilerParams(
        dimension_semantics=("parallel", "arbitrary"),
        vmem_limit_bytes=vmem_limit,
    )
    cparams_p2 = pltpu.CompilerParams(
        dimension_semantics=("parallel",),
        vmem_limit_bytes=vmem_limit,
    )

    # ---- Pass 1: per-channel [sum, sum_sq] of the conv output (conv never hits HBM) ----
    partials = pl.pallas_call(
        functools.partial(_stats_kernel, k_taps=K, l_out_pad=L_out_pad, l_out=L_out),
        grid=(NS, NT),
        in_specs=[
            pl.BlockSpec((Nb, Cin, L_pad), lambda s, t: (s * NT + t, 0, 0)),
            pl.BlockSpec((K, Cout, Cin), lambda s, t: (0, 0, 0)),
        ],
        out_specs=pl.BlockSpec((1, Cout, 2), lambda s, t: (s, 0, 0)),
        out_shape=jax.ShapeDtypeStruct((NS, Cout, 2), jnp.float32),
        compiler_params=cparams_p1,
    )(x_p, w)

    # ---- Fold BN into per-channel (s, t): tiny (Cout,) XLA op between the passes ----
    stats = jnp.sum(partials, axis=0)                                # (Cout, 2)
    inv_count = 1.0 / float(N * L_out)
    mean = stats[:, 0] * inv_count
    # Single-pass biased variance (PyTorch train mode). NOTE: E[x^2]-E[x]^2 in f32 can
    # cancel when |mean| >> std; the clamp guards rounding — a Welford-style merge of
    # per-tile (count, mean, M2) is the robust upgrade for extreme N*L.
    var = jnp.maximum(stats[:, 1] * inv_count - mean * mean, 0.0)
    s_c = gamma.astype(jnp.float32) * lax.rsqrt(var + BN_EPS)
    t_c = beta.astype(jnp.float32) - mean * s_c
    s2 = s_c.reshape(Cout, 1)
    t2 = t_c.reshape(Cout, 1)

    # ---- Pass 2: recompute conv, folded affine + ReLU, lane-dense f32 store ----
    y_pad = pl.pallas_call(
        functools.partial(_conv_bn_relu_kernel, k_taps=K, l_out_pad=L_out_pad),
        grid=(n_tiles,),
        in_specs=[
            pl.BlockSpec((Nb, Cin, L_pad), lambda n: (n, 0, 0)),
            pl.BlockSpec((K, Cout, Cin), lambda n: (0, 0, 0)),
            pl.BlockSpec((Cout, 1), lambda n: (0, 0)),
            pl.BlockSpec((Cout, 1), lambda n: (0, 0)),
        ],
        out_specs=pl.BlockSpec((Nb, Cout, L_out_pad), lambda n: (n, 0, 0)),
        out_shape=jax.ShapeDtypeStruct((N, Cout, L_out_pad), jnp.float32),
        compiler_params=cparams_p2,
    )(x_p, w, s2, t2)

    if L_out_pad != L_out:
        y_pad = y_pad[:, :, :L_out]
    return y_pad  # (N, Cout, L_out) — native PyTorch NCL layout, f32 for parity


def _reference(x_ncl, weight, bias, gamma, beta, matmul_dtype=jnp.float32):
    """Pure-JAX reference mirroring PyTorch Conv1d + BatchNorm1d(train) + ReLU.

    `matmul_dtype` controls the conv-input precision so the kernel's bf16 matmul can be
    validated at matched precision as well as against full f32. Keeps the conv bias,
    proving its exact cancellation by training-mode BN.
    """
    conv = lax.conv_general_dilated(
        x_ncl.astype(matmul_dtype), weight.astype(matmul_dtype),
        window_strides=(1,), padding="VALID",
        dimension_numbers=("NCH", "OIH", "NCH"),
        preferred_element_type=jnp.float32,
    ) + bias.reshape(1, -1, 1)
    mean = jnp.mean(conv, axis=(0, 2), keepdims=True)
    var = jnp.mean((conv - mean) ** 2, axis=(0, 2), keepdims=True)   # biased (train mode)
    y = (conv - mean) * lax.rsqrt(var + BN_EPS)
    y = y * gamma.reshape(1, -1, 1) + beta.reshape(1, -1, 1)
    return jnp.maximum(y, 0.0)


if __name__ == "__main__":
    # Small shapes consistent with ConvBNReLU1D(in_channels=4, out_channels=8, kernel_size=3)
    N, Cin, Cout, L, K = 2, 4, 8, 16, 3

    key = jax.random.PRNGKey(0)
    kx, kw, kb = jax.random.split(key, 3)

    # Input in PyTorch NCL layout.
    x = jax.random.normal(kx, (N, Cin, L), dtype=jnp.float32)

    # Parameter init matching PyTorch defaults:
    #   Conv1d: U(-1/sqrt(Cin*K), 1/sqrt(Cin*K)) for weight and bias.
    #   BatchNorm1d: weight=1, bias=0.
    bound = 1.0 / jnp.sqrt(jnp.float32(Cin * K))
    weight = jax.random.uniform(kw, (Cout, Cin, K), jnp.float32, -bound, bound)
    bias = jax.random.uniform(kb, (Cout,), jnp.float32, -bound, bound)
    gamma = jnp.ones((Cout,), jnp.float32)
    beta = jnp.zeros((Cout,), jnp.float32)

    out = jax.block_until_ready(conv_bn_relu_1d(x, weight, bias, gamma, beta))
    assert out.shape == (N, Cout, L - K + 1), out.shape

    # Matched-precision reference (conv inputs in bf16, like the kernel): tight tolerance
    # validates the conv/BN/ReLU algorithm itself.
    ref_bf = jax.block_until_ready(_reference(x, weight, bias, gamma, beta, jnp.bfloat16))
    err_bf = float(jnp.max(jnp.abs(out - ref_bf)))
    assert jnp.allclose(out, ref_bf, atol=1e-3, rtol=1e-3), err_bf

    # Full-f32 reference: loose tolerance bounds the bf16 matmul-input quantization error.
    ref_f32 = jax.block_until_ready(_reference(x, weight, bias, gamma, beta, jnp.float32))
    err_f32 = float(jnp.max(jnp.abs(out - ref_f32)))
    assert jnp.allclose(out, ref_f32, atol=1e-1, rtol=1e-1), err_f32

    print("KERNEL_OK")
</pallas_src>

<mosaic_0001>
module attributes {stable_mosaic.version = 11 : i64} {
  func.func @_stats_kernel(%arg0: i32, %arg1: i32, %arg2: memref<2x4x130xf32, #tpu.memory_space<vmem>>, %arg3: memref<3x8x4xbf16, #tpu.memory_space<vmem>>, %arg4: memref<1x8x2xf32, #tpu.memory_space<vmem>>) attributes {dimension_semantics = [#tpu.dimension_semantics<parallel>, #tpu.dimension_semantics<arbitrary>], iteration_bounds = array<i64: 1, 1>, scalar_prefetch = 0 : i64, scratch_operands = 0 : i64, tpu.core_type = #tpu.core_type<tc>, window_params = [{transform_indices = @transform_0, window_bounds = array<i64: 2, 4, 130>}, {pipeline_mode = #tpu.pipeline_mode<synchronous>, transform_indices = @transform_1, window_bounds = array<i64: 3, 8, 4>}, {transform_indices = @transform_2, window_bounds = array<i64: 1, 8, 2>}]} {
    %c0_i32 = arith.constant 0 : i32
    %0 = arith.cmpi eq, %arg1, %c0_i32 : i32
    %1 = arith.extui %0 : i1 to i32
    %c0_i32_0 = arith.constant 0 : i32
    %2 = arith.cmpi ne, %1, %c0_i32_0 : i32
    scf.if %2 {
      %cst_27 = arith.constant 0.000000e+00 : f32
      %74 = vector.broadcast %cst_27 : f32 to vector<1x8x2xf32>
      %c0_28 = arith.constant 0 : index
      %c0_29 = arith.constant 0 : index
      %c0_30 = arith.constant 0 : index
      %75 = vector.load %arg4[%c0_28, %c0_29, %c0_30] : memref<1x8x2xf32, #tpu.memory_space<vmem>>, vector<1x8x2xf32>
      tpu.vector_store %arg4[%c0_28, %c0_29, %c0_30], %74 {strides = array<i32>} : memref<1x8x2xf32, #tpu.memory_space<vmem>>, vector<1x8x2xf32>,
    } else {
    }
    %c0 = arith.constant 0 : index
    %c0_1 = arith.constant 0 : index
    %c0_2 = arith.constant 0 : index
    %3 = vector.load %arg2[%c0, %c0_1, %c0_2] : memref<2x4x130xf32, #tpu.memory_space<vmem>>, vector<2x4x130xf32>
    %4 = arith.truncf %3 : vector<2x4x130xf32> to vector<2x4x130xbf16>
    %c0_3 = arith.constant 0 : index
    %c0_4 = arith.constant 0 : index
    %c0_5 = arith.constant 0 : index
    %5 = vector.load %arg3[%c0_3, %c0_4, %c0_5] : memref<3x8x4xbf16, #tpu.memory_space<vmem>>, vector<3x8x4xbf16>
    %6 = tpu.iota {dimensions = array<i32: 1>} : vector<8x128xi32>
    %c14_i32 = arith.constant 14 : i32
    %7 = vector.broadcast %c14_i32 : i32 to vector<8x128xi32>
    %8 = arith.cmpi slt, %6, %7 : vector<8x128xi32>
    %cst = arith.constant 0.000000e+00 : f32
    %9 = vector.broadcast %cst : f32 to vector<8x1xf32>
    %cst_6 = arith.constant 0.000000e+00 : f32
    %10 = vector.broadcast %cst_6 : f32 to vector<8x1xf32>
    %cst_7 = arith.constant 0.000000e+00 : f32
    %11 = vector.broadcast %cst_7 : f32 to vector<8x128xf32>
    %12 = vector.extract_strided_slice %5 {offsets = [0, 0, 0], sizes = [1, 8, 4], strides = [1, 1, 1]} : vector<3x8x4xbf16> to vector<1x8x4xbf16>
    %13 = vector.shape_cast %12 : vector<1x8x4xbf16> to vector<8x4xbf16>
    %14 = vector.extract_strided_slice %4 {offsets = [0, 0, 0], sizes = [1, 4, 128], strides = [1, 1, 1]} : vector<2x4x130xbf16> to vector<1x4x128xbf16>
    %15 = vector.shape_cast %14 : vector<1x4x128xbf16> to vector<4x128xbf16>
    %cst_8 = arith.constant dense<0.000000e+00> : vector<8x128xf32>
    %16 = tpu.matmul %13, %15, %cst_8 {dimension_numbers = #tpu.dot_dimension_numbers<[1], [0], [0], [1], [0, 0, 1, 1], [], []>} : vector<8x4xbf16>, vector<4x128xbf16>, vector<8x128xf32> -> vector<8x128xf32>
    %17 = arith.addf %11, %16 : vector<8x128xf32>
    %18 = vector.extract_strided_slice %5 {offsets = [1, 0, 0], sizes = [1, 8, 4], strides = [1, 1, 1]} : vector<3x8x4xbf16> to vector<1x8x4xbf16>
    %19 = vector.shape_cast %18 : vector<1x8x4xbf16> to vector<8x4xbf16>
    %20 = vector.extract_strided_slice %4 {offsets = [0, 0, 1], sizes = [1, 4, 128], strides = [1, 1, 1]} : vector<2x4x130xbf16> to vector<1x4x128xbf16>
    %21 = vector.shape_cast %20 : vector<1x4x128xbf16> to vector<4x128xbf16>
    %cst_9 = arith.constant dense<0.000000e+00> : vector<8x128xf32>
    %22 = tpu.matmul %19, %21, %cst_9 {dimension_numbers = #tpu.dot_dimension_numbers<[1], [0], [0], [1], [0, 0, 1, 1], [], []>} : vector<8x4xbf16>, vector<4x128xbf16>, vector<8x128xf32> -> vector<8x128xf32>
    %23 = arith.addf %17, %22 : vector<8x128xf32>
    %24 = vector.extract_strided_slice %5 {offsets = [2, 0, 0], sizes = [1, 8, 4], strides = [1, 1, 1]} : vector<3x8x4xbf16> to vector<1x8x4xbf16>
    %25 = vector.shape_cast %24 : vector<1x8x4xbf16> to vector<8x4xbf16>
    %26 = vector.extract_strided_slice %4 {offsets = [0, 0, 2], sizes = [1, 4, 128], strides = [1, 1, 1]} : vector<2x4x130xbf16> to vector<1x4x128xbf16>
    %27 = vector.shape_cast %26 : vector<1x4x128xbf16> to vector<4x128xbf16>
    %cst_10 = arith.constant dense<0.000000e+00> : vector<8x128xf32>
    %28 = tpu.matmul %25, %27, %cst_10 {dimension_numbers = #tpu.dot_dimension_numbers<[1], [0], [0], [1], [0, 0, 1, 1], [], []>} : vector<8x4xbf16>, vector<4x128xbf16>, vector<8x128xf32> -> vector<8x128xf32>
    %29 = arith.addf %23, %28 : vector<8x128xf32>
    %cst_11 = arith.constant 0.000000e+00 : f32
    %30 = vector.broadcast %cst_11 : f32 to vector<8x128xf32>
    %31 = arith.select %8, %29, %30 : vector<8x128xi1>, vector<8x128xf32>
    %cst_12 = arith.constant dense<0.000000e+00> : vector<8xf32>
    %32 = vector.multi_reduction <add>, %31, %cst_12 [1] : vector<8x128xf32> to vector<8xf32>
    %33 = vector.shape_cast %32 : vector<8xf32> to vector<8x1xf32>
    %34 = arith.addf %9, %33 : vector<8x1xf32>
    %35 = arith.mulf %31, %31 : vector<8x128xf32>
    %cst_13 = arith.constant dense<0.000000e+00> : vector<8xf32>
    %36 = vector.multi_reduction <add>, %35, %cst_13 [1] : vector<8x128xf32> to vector<8xf32>
    %37 = vector.shape_cast %36 : vector<8xf32> to vector<8x1xf32>
    %38 = arith.addf %10, %37 : vector<8x1xf32>
    %cst_14 = arith.constant 0.000000e+00 : f32
    %39 = vector.broadcast %cst_14 : f32 to vector<8x128xf32>
    %40 = vector.extract_strided_slice %5 {offsets = [0, 0, 0], sizes = [1, 8, 4], strides = [1, 1, 1]} : vector<3x8x4xbf16> to vector<1x8x4xbf16>
    %41 = vector.shape_cast %40 : vector<1x8x4xbf16> to vector<8x4xbf16>
    %42 = vector.extract_strided_slice %4 {offsets = [1, 0, 0], sizes = [1, 4, 128], strides = [1, 1, 1]} : vector<2x4x130xbf16> to vector<1x4x128xbf16>
    %43 = vector.shape_cast %42 : vector<1x4x128xbf16> to vector<4x128xbf16>
    %cst_15 = arith.constant dense<0.000000e+00> : vector<8x128xf32>
    %44 = tpu.matmul %41, %43, %cst_15 {dimension_numbers = #tpu.dot_dimension_numbers<[1], [0], [0], [1], [0, 0, 1, 1], [], []>} : vector<8x4xbf16>, vector<4x128xbf16>, vector<8x128xf32> -> vector<8x128xf32>
    %45 = arith.addf %39, %44 : vector<8x128xf32>
    %46 = vector.extract_strided_slice %5 {offsets = [1, 0, 0], sizes = [1, 8, 4], strides = [1, 1, 1]} : vector<3x8x4xbf16> to vector<1x8x4xbf16>
    %47 = vector.shape_cast %46 : vector<1x8x4xbf16> to vector<8x4xbf16>
    %48 = vector.extract_strided_slice %4 {offsets = [1, 0, 1], sizes = [1, 4, 128], strides = [1, 1, 1]} : vector<2x4x130xbf16> to vector<1x4x128xbf16>
    %49 = vector.shape_cast %48 : vector<1x4x128xbf16> to vector<4x128xbf16>
    %cst_16 = arith.constant dense<0.000000e+00> : vector<8x128xf32>
    %50 = tpu.matmul %47, %49, %cst_16 {dimension_numbers = #tpu.dot_dimension_numbers<[1], [0], [0], [1], [0, 0, 1, 1], [], []>} : vector<8x4xbf16>, vector<4x128xbf16>, vector<8x128xf32> -> vector<8x128xf32>
    %51 = arith.addf %45, %50 : vector<8x128xf32>
    %52 = vector.extract_strided_slice %5 {offsets = [2, 0, 0], sizes = [1, 8, 4], strides = [1, 1, 1]} : vector<3x8x4xbf16> to vector<1x8x4xbf16>
    %53 = vector.shape_cast %52 : vector<1x8x4xbf16> to vector<8x4xbf16>
    %54 = vector.extract_strided_slice %4 {offsets = [1, 0, 2], sizes = [1, 4, 128], strides = [1, 1, 1]} : vector<2x4x130xbf16> to vector<1x4x128xbf16>
    %55 = vector.shape_cast %54 : vector<1x4x128xbf16> to vector<4x128xbf16>
    %cst_17 = arith.constant dense<0.000000e+00> : vector<8x128xf32>
    %56 = tpu.matmul %53, %55, %cst_17 {dimension_numbers = #tpu.dot_dimension_numbers<[1], [0], [0], [1], [0, 0, 1, 1], [], []>} : vector<8x4xbf16>, vector<4x128xbf16>, vector<8x128xf32> -> vector<8x128xf32>
    %57 = arith.addf %51, %56 : vector<8x128xf32>
    %cst_18 = arith.constant 0.000000e+00 : f32
    %58 = vector.broadcast %cst_18 : f32 to vector<8x128xf32>
    %59 = arith.select %8, %57, %58 : vector<8x128xi1>, vector<8x128xf32>
    %cst_19 = arith.constant dense<0.000000e+00> : vector<8xf32>
    %60 = vector.multi_reduction <add>, %59, %cst_19 [1] : vector<8x128xf32> to vector<8xf32>
    %61 = vector.shape_cast %60 : vector<8xf32> to vector<8x1xf32>
    %62 = arith.addf %34, %61 : vector<8x1xf32>
    %63 = arith.mulf %59, %59 : vector<8x128xf32>
    %cst_20 = arith.constant dense<0.000000e+00> : vector<8xf32>
    %64 = vector.multi_reduction <add>, %63, %cst_20 [1] : vector<8x128xf32> to vector<8xf32>
    %65 = vector.shape_cast %64 : vector<8xf32> to vector<8x1xf32>
    %66 = arith.addf %38, %65 : vector<8x1xf32>
    %c0_21 = arith.constant 0 : index
    %c0_22 = arith.constant 0 : index
    %c0_23 = arith.constant 0 : index
    %67 = vector.load %arg4[%c0_21, %c0_22, %c0_23] : memref<1x8x2xf32, #tpu.memory_space<vmem>>, vector<1x8x2xf32>
    %68 = vector.shape_cast %67 : vector<1x8x2xf32> to vector<8x2xf32>
    %69 = tpu.concatenate %62, %66 in 1 : vector<8x1xf32>, vector<8x1xf32> -> vector<8x2xf32>
    %70 = arith.addf %68, %69 : vector<8x2xf32>
    %c0_24 = arith.constant 0 : index
    %c0_25 = arith.constant 0 : index
    %c0_26 = arith.constant 0 : index
    %71 = vector.load %arg4[%c0_24, %c0_25, %c0_26] : memref<1x8x2xf32, #tpu.memory_space<vmem>>, vector<1x8x2xf32>
    %72 = vector.shape_cast %71 : vector<1x8x2xf32> to vector<8x2xf32>
    %73 = vector.shape_cast %70 : vector<8x2xf32> to vector<1x8x2xf32>
    tpu.vector_store %arg4[%c0_24, %c0_25, %c0_26], %73 {strides = array<i32>} : memref<1x8x2xf32, #tpu.memory_space<vmem>>, vector<1x8x2xf32>,
    return
  }
  func.func @transform_0(%arg0: i32, %arg1: i32) -> (i32, i32, i32) {
    %c1_i32 = arith.constant 1 : i32
    %0 = arith.muli %arg0, %c1_i32 : i32
    %1 = arith.addi %0, %arg1 : i32
    %c0_i32 = arith.constant 0 : i32
    %c0_i32_0 = arith.constant 0 : i32
    %c0_i32_1 = arith.constant 0 : i32
    return %1, %c0_i32, %c0_i32_0 : i32, i32, i32
  }
  func.func @transform_1(%arg0: i32, %arg1: i32) -> (i32, i32, i32) {
    %c0_i32 = arith.constant 0 : i32
    %c0_i32_0 = arith.constant 0 : i32
    %c0_i32_1 = arith.constant 0 : i32
    %c0_i32_2 = arith.constant 0 : i32
    return %c0_i32, %c0_i32_0, %c0_i32_1 : i32, i32, i32
  }
  func.func @transform_2(%arg0: i32, %arg1: i32) -> (i32, i32, i32) {
    %c0_i32 = arith.constant 0 : i32
    %c0_i32_0 = arith.constant 0 : i32
    %c0_i32_1 = arith.constant 0 : i32
    return %arg0, %c0_i32, %c0_i32_0 : i32, i32, i32
  }
}

module attributes {stable_mosaic.version = 11 : i64} {
  func.func @_conv_bn_relu_kernel(%arg0: i32, %arg1: memref<2x4x130xf32, #tpu.memory_space<vmem>>, %arg2: memref<3x8x4xbf16, #tpu.memory_space<vmem>>, %arg3: memref<8x1xf32, #tpu.memory_space<vmem>>, %arg4: memref<8x1xf32, #tpu.memory_space<vmem>>, %arg5: memref<2x8x128xf32, #tpu.memory_space<vmem>>) attributes {dimension_semantics = [#tpu.dimension_semantics<parallel>], iteration_bounds = array<i64: 1>, scalar_prefetch = 0 : i64, scratch_operands = 0 : i64, tpu.core_type = #tpu.core_type<tc>, window_params = [{transform_indices = @transform_0, window_bounds = array<i64: 2, 4, 130>}, {pipeline_mode = #tpu.pipeline_mode<synchronous>, transform_indices = @transform_1, window_bounds = array<i64: 3, 8, 4>}, {pipeline_mode = #tpu.pipeline_mode<synchronous>, transform_indices = @transform_2, window_bounds = array<i64: 8, 1>}, {pipeline_mode = #tpu.pipeline_mode<synchronous>, transform_indices = @transform_3, window_bounds = array<i64: 8, 1>}, {transform_indices = @transform_4, window_bounds = array<i64: 2, 8, 128>}]} {
    %c0 = arith.constant 0 : index
    %c0_0 = arith.constant 0 : index
    %c0_1 = arith.constant 0 : index
    %0 = vector.load %arg1[%c0, %c0_0, %c0_1] : memref<2x4x130xf32, #tpu.memory_space<vmem>>, vector<2x4x130xf32>
    %1 = arith.truncf %0 : vector<2x4x130xf32> to vector<2x4x130xbf16>
    %c0_2 = arith.constant 0 : index
    %c0_3 = arith.constant 0 : index
    %c0_4 = arith.constant 0 : index
    %2 = vector.load %arg2[%c0_2, %c0_3, %c0_4] : memref<3x8x4xbf16, #tpu.memory_space<vmem>>, vector<3x8x4xbf16>
    %c0_5 = arith.constant 0 : index
    %c0_6 = arith.constant 0 : index
    %3 = vector.load %arg3[%c0_5, %c0_6] : memref<8x1xf32, #tpu.memory_space<vmem>>, vector<8x1xf32>
    %c0_7 = arith.constant 0 : index
    %c0_8 = arith.constant 0 : index
    %4 = vector.load %arg4[%c0_7, %c0_8] : memref<8x1xf32, #tpu.memory_space<vmem>>, vector<8x1xf32>
    %cst = arith.constant 0.000000e+00 : f32
    %5 = vector.broadcast %cst : f32 to vector<8x128xf32>
    %6 = vector.extract_strided_slice %2 {offsets = [0, 0, 0], sizes = [1, 8, 4], strides = [1, 1, 1]} : vector<3x8x4xbf16> to vector<1x8x4xbf16>
    %7 = vector.shape_cast %6 : vector<1x8x4xbf16> to vector<8x4xbf16>
    %8 = vector.extract_strided_slice %1 {offsets = [0, 0, 0], sizes = [1, 4, 128], strides = [1, 1, 1]} : vector<2x4x130xbf16> to vector<1x4x128xbf16>
    %9 = vector.shape_cast %8 : vector<1x4x128xbf16> to vector<4x128xbf16>
    %cst_9 = arith.constant dense<0.000000e+00> : vector<8x128xf32>
    %10 = tpu.matmul %7, %9, %cst_9 {dimension_numbers = #tpu.dot_dimension_numbers<[1], [0], [0], [1], [0, 0, 1, 1], [], []>} : vector<8x4xbf16>, vector<4x128xbf16>, vector<8x128xf32> -> vector<8x128xf32>
    %11 = arith.addf %5, %10 : vector<8x128xf32>
    %12 = vector.extract_strided_slice %2 {offsets = [1, 0, 0], sizes = [1, 8, 4], strides = [1, 1, 1]} : vector<3x8x4xbf16> to vector<1x8x4xbf16>
    %13 = vector.shape_cast %12 : vector<1x8x4xbf16> to vector<8x4xbf16>
    %14 = vector.extract_strided_slice %1 {offsets = [0, 0, 1], sizes = [1, 4, 128], strides = [1, 1, 1]} : vector<2x4x130xbf16> to vector<1x4x128xbf16>
    %15 = vector.shape_cast %14 : vector<1x4x128xbf16> to vector<4x128xbf16>
    %cst_10 = arith.constant dense<0.000000e+00> : vector<8x128xf32>
    %16 = tpu.matmul %13, %15, %cst_10 {dimension_numbers = #tpu.dot_dimension_numbers<[1], [0], [0], [1], [0, 0, 1, 1], [], []>} : vector<8x4xbf16>, vector<4x128xbf16>, vector<8x128xf32> -> vector<8x128xf32>
    %17 = arith.addf %11, %16 : vector<8x128xf32>
    %18 = vector.extract_strided_slice %2 {offsets = [2, 0, 0], sizes = [1, 8, 4], strides = [1, 1, 1]} : vector<3x8x4xbf16> to vector<1x8x4xbf16>
    %19 = vector.shape_cast %18 : vector<1x8x4xbf16> to vector<8x4xbf16>
    %20 = vector.extract_strided_slice %1 {offsets = [0, 0, 2], sizes = [1, 4, 128], strides = [1, 1, 1]} : vector<2x4x130xbf16> to vector<1x4x128xbf16>
    %21 = vector.shape_cast %20 : vector<1x4x128xbf16> to vector<4x128xbf16>
    %cst_11 = arith.constant dense<0.000000e+00> : vector<8x128xf32>
    %22 = tpu.matmul %19, %21, %cst_11 {dimension_numbers = #tpu.dot_dimension_numbers<[1], [0], [0], [1], [0, 0, 1, 1], [], []>} : vector<8x4xbf16>, vector<4x128xbf16>, vector<8x128xf32> -> vector<8x128xf32>
    %23 = arith.addf %17, %22 : vector<8x128xf32>
    %24 = vector.broadcast %3 : vector<8x1xf32> to vector<8x128xf32>
    %25 = arith.mulf %23, %24 : vector<8x128xf32>
    %26 = vector.broadcast %4 : vector<8x1xf32> to vector<8x128xf32>
    %27 = arith.addf %25, %26 : vector<8x128xf32>
    %cst_12 = arith.constant 0.000000e+00 : f32
    %28 = vector.broadcast %cst_12 : f32 to vector<8x128xf32>
    %29 = arith.maximumf %27, %28 : vector<8x128xf32>
    %c0_13 = arith.constant 0 : index
    %c0_14 = arith.constant 0 : index
    %c0_15 = arith.constant 0 : index
    %30 = vector.load %arg5[%c0_13, %c0_14, %c0_15] : memref<2x8x128xf32, #tpu.memory_space<vmem>>, vector<1x8x128xf32>
    %31 = vector.shape_cast %30 : vector<1x8x128xf32> to vector<8x128xf32>
    %32 = vector.shape_cast %29 : vector<8x128xf32> to vector<1x8x128xf32>
    tpu.vector_store %arg5[%c0_13, %c0_14, %c0_15], %32 {strides = array<i32>} : memref<2x8x128xf32, #tpu.memory_space<vmem>>, vector<1x8x128xf32>,
    %cst_16 = arith.constant 0.000000e+00 : f32
    %33 = vector.broadcast %cst_16 : f32 to vector<8x128xf32>
    %34 = vector.extract_strided_slice %2 {offsets = [0, 0, 0], sizes = [1, 8, 4], strides = [1, 1, 1]} : vector<3x8x4xbf16> to vector<1x8x4xbf16>
    %35 = vector.shape_cast %34 : vector<1x8x4xbf16> to vector<8x4xbf16>
    %36 = vector.extract_strided_slice %1 {offsets = [1, 0, 0], sizes = [1, 4, 128], strides = [1, 1, 1]} : vector<2x4x130xbf16> to vector<1x4x128xbf16>
    %37 = vector.shape_cast %36 : vector<1x4x128xbf16> to vector<4x128xbf16>
    %cst_17 = arith.constant dense<0.000000e+00> : vector<8x128xf32>
    %38 = tpu.matmul %35, %37, %cst_17 {dimension_numbers = #tpu.dot_dimension_numbers<[1], [0], [0], [1], [0, 0, 1, 1], [], []>} : vector<8x4xbf16>, vector<4x128xbf16>, vector<8x128xf32> -> vector<8x128xf32>
    %39 = arith.addf %33, %38 : vector<8x128xf32>
    %40 = vector.extract_strided_slice %2 {offsets = [1, 0, 0], sizes = [1, 8, 4], strides = [1, 1, 1]} : vector<3x8x4xbf16> to vector<1x8x4xbf16>
    %41 = vector.shape_cast %40 : vector<1x8x4xbf16> to vector<8x4xbf16>
    %42 = vector.extract_strided_slice %1 {offsets = [1, 0, 1], sizes = [1, 4, 128], strides = [1, 1, 1]} : vector<2x4x130xbf16> to vector<1x4x128xbf16>
    %43 = vector.shape_cast %42 : vector<1x4x128xbf16> to vector<4x128xbf16>
    %cst_18 = arith.constant dense<0.000000e+00> : vector<8x128xf32>
    %44 = tpu.matmul %41, %43, %cst_18 {dimension_numbers = #tpu.dot_dimension_numbers<[1], [0], [0], [1], [0, 0, 1, 1], [], []>} : vector<8x4xbf16>, vector<4x128xbf16>, vector<8x128xf32> -> vector<8x128xf32>
    %45 = arith.addf %39, %44 : vector<8x128xf32>
    %46 = vector.extract_strided_slice %2 {offsets = [2, 0, 0], sizes = [1, 8, 4], strides = [1, 1, 1]} : vector<3x8x4xbf16> to vector<1x8x4xbf16>
    %47 = vector.shape_cast %46 : vector<1x8x4xbf16> to vector<8x4xbf16>
    %48 = vector.extract_strided_slice %1 {offsets = [1, 0, 2], sizes = [1, 4, 128], strides = [1, 1, 1]} : vector<2x4x130xbf16> to vector<1x4x128xbf16>
    %49 = vector.shape_cast %48 : vector<1x4x128xbf16> to vector<4x128xbf16>
    %cst_19 = arith.constant dense<0.000000e+00> : vector<8x128xf32>
    %50 = tpu.matmul %47, %49, %cst_19 {dimension_numbers = #tpu.dot_dimension_numbers<[1], [0], [0], [1], [0, 0, 1, 1], [], []>} : vector<8x4xbf16>, vector<4x128xbf16>, vector<8x128xf32> -> vector<8x128xf32>
    %51 = arith.addf %45, %50 : vector<8x128xf32>
    %52 = vector.broadcast %3 : vector<8x1xf32> to vector<8x128xf32>
    %53 = arith.mulf %51, %52 : vector<8x128xf32>
    %54 = vector.broadcast %4 : vector<8x1xf32> to vector<8x128xf32>
    %55 = arith.addf %53, %54 : vector<8x128xf32>
    %cst_20 = arith.constant 0.000000e+00 : f32
    %56 = vector.broadcast %cst_20 : f32 to vector<8x128xf32>
    %57 = arith.maximumf %55, %56 : vector<8x128xf32>
    %c1 = arith.constant 1 : index
    %c0_21 = arith.constant 0 : index
    %c0_22 = arith.constant 0 : index
    %58 = vector.load %arg5[%c1, %c0_21, %c0_22] : memref<2x8x128xf32, #tpu.memory_space<vmem>>, vector<1x8x128xf32>
    %59 = vector.shape_cast %58 : vector<1x8x128xf32> to vector<8x128xf32>
    %60 = vector.shape_cast %57 : vector<8x128xf32> to vector<1x8x128xf32>
    tpu.vector_store %arg5[%c1, %c0_21, %c0_22], %60 {strides = array<i32>} : memref<2x8x128xf32, #tpu.memory_space<vmem>>, vector<1x8x128xf32>,
    return
  }
  func.func @transform_0(%arg0: i32) -> (i32, i32, i32) {
    %c0_i32 = arith.constant 0 : i32
    %c0_i32_0 = arith.constant 0 : i32
    %c0_i32_1 = arith.constant 0 : i32
    return %arg0, %c0_i32, %c0_i32_0 : i32, i32, i32
  }
  func.func @transform_1(%arg0: i32) -> (i32, i32, i32) {
    %c0_i32 = arith.constant 0 : i32
    %c0_i32_0 = arith.constant 0 : i32
    %c0_i32_1 = arith.constant 0 : i32
    %c0_i32_2 = arith.constant 0 : i32
    return %c0_i32, %c0_i32_0, %c0_i32_1 : i32, i32, i32
  }
  func.func @transform_2(%arg0: i32) -> (i32, i32) {
    %c0_i32 = arith.constant 0 : i32
    %c0_i32_0 = arith.constant 0 : i32
    %c0_i32_1 = arith.constant 0 : i32
    return %c0_i32, %c0_i32_0 : i32, i32
  }
  func.func @transform_3(%arg0: i32) -> (i32, i32) {
    %c0_i32 = arith.constant 0 : i32
    %c0_i32_0 = arith.constant 0 : i32
    %c0_i32_1 = arith.constant 0 : i32
    return %c0_i32, %c0_i32_0 : i32, i32
  }
  func.func @transform_4(%arg0: i32) -> (i32, i32, i32) {
    %c0_i32 = arith.constant 0 : i32
    %c0_i32_0 = arith.constant 0 : i32
    %c0_i32_1 = arith.constant 0 : i32
    return %arg0, %c0_i32, %c0_i32_0 : i32, i32, i32
  }
}

</mosaic_0001>

<llo_original>
// kernel: conv_bn_relu_1d.2
$region0: #{conv_bn_relu_1d.2}
  #allocation0 [shape = 'u32[]', space=smem, size = 0x4, offset = 0x4, fixed_abs, tag = 'smem constant byte address 0x4 - core index']
  #allocation1 [shape = 'u32[72,128]{1,0:T(1,128)}', space=vmem, size = 0x9000, scoped, tag = 'internal scratch']
  %s0 = inlined_call_operand.vmem [shape: f32[2,4,130], index: 0, kind: input, shape index: {}]
  %s1 = inlined_call_operand.vmem [shape: bf16[3,8,4], index: 1, kind: input, shape index: {}]
  %s2 = inlined_call_operand.vmem [shape: f32[1,8,2], index: 2, kind: output, shape index: {}]
  %s3 = sld [smem:[#allocation0]]
  $region22: #{conv_bn_relu_1d.2} parent=0
    _
  %s5 = ssub.s32 1, %s3
  %s6 = scalar_select 0, %s5, %s3
  // Predicated region
  $region2: #{conv_bn_relu_1d.2} parent=0 // pred_check
    _
  $region3: #{conv_bn_relu_1d.2} parent=0 // pred_check_branch
    %8 = sbr.rel (0) target = $region5
  $region4: #{conv_bn_relu_1d.2} parent=0 // pred_region
    %s9 = sadd.s32 0, 0
    %s10 = smul.u32 2, %s9
    %p11 = scmp.lt.s32.totalorder %s10, 1
    %s12 = scalar_select %p11, %s10, 1
    %s13 = smul.addr %s12, 2
    %s14 = smul.addr %s13, 4
    %s15 = scalar_lea.vmem %s0, %s14
    %s16 = sadd.s32 0, 0
    %s17 = smul.u32 2, %s16
  $region5: #{conv_bn_relu_1d.2} parent=0 // pred_fallthru
    _
  // Predicated region
  $region6: #{conv_bn_relu_1d.2} parent=0 // pred_check
    _
  $region7: #{conv_bn_relu_1d.2} parent=0 // pred_check_branch
    %19 = sbr.rel (0) target = $region9
  $region8: #{conv_bn_relu_1d.2} parent=0 // pred_region
    _
  $region9: #{conv_bn_relu_1d.2} parent=0 // pred_fallthru
    _
  %s20 = sadd.s32 0, 0
  %s21 = smul.u32 2, %s20
  %p22 = scmp.lt.s32.totalorder %s21, 1
  %s23 = scalar_select %p22, %s21, 1
  %s24 = smul.addr %s23, 2
  %s25 = smul.addr %s24, 4
  %s26 = scalar_lea.vmem %s0, %s25
  %s27 = sadd.s32 0, 0
  %s28 = smul.u32 2, %s27
  %p29 = scmp.lt.s32.totalorder %s28, 1
  %s30 = scalar_select %p29, %s28, 1
  %s31 = smul.addr %s30, 2
  %s32 = smul.addr %s31, 4
  %s33 = scalar_lea.vmem %s0, %s32
  %s34 = sadd.s32 0, 0
  %s35 = smul.u32 2, %s34
  %p37 = scmp.eq.s32.totalorder 0, 0
  // Predicated region
  $region10: #{conv_bn_relu_1d.2} parent=0 // pred_check
    %p38 = pneg %p37
  $region11: #{conv_bn_relu_1d.2} parent=0 // pred_check_branch
    %40 = sbr.rel (%p38) target = $region13
  $region12: #{conv_bn_relu_1d.2} parent=0 // pred_region
    %vm41 = vcmask 15360
    %42 = vst.msk [vmem:[%s2] sm:$0xff] %vm41, 0.0
  $region13: #{conv_bn_relu_1d.2} parent=0 // pred_fallthru
    _
  %v43 = vld [vmem:[%s33] sm:$0xff]
  %v44 = vld [vmem:[%s33 + $0x8] sm:$0xff]
  %47 = vst [vmem:[#allocation1] ss:$2 sm:$0xff] %v43
  %v48 = vld.sshfl [vmem:[#allocation1] sm:$0xff pattern:$0x75316420]
  %v49 = vld.sshfl [vmem:[#allocation1 + $0x8] sm:$0xff pattern:$0x75316420]
  %s50 = scalar_lea.vmem [#allocation1], 16
  %51 = vst [vmem:[%s50] ss:$2 sm:$0xff] %v44
  %v52 = vld.sshfl [vmem:[#allocation1 + $0x10] sm:$0xff pattern:$0x75316420]
  %v53 = vld.sshfl [vmem:[#allocation1 + $0x18] sm:$0xff pattern:$0x75316420]
  %v58 = vpack.c.bf16 %v49, %v48
  %v59 = vpack.c.bf16 %v53, %v52
  %v60 = vld [vmem:[%s1] sm:$0xf]
  %v61 = vld [vmem:[%s1 + $0x4] sm:$0xf]
  %v62 = vld [vmem:[%s1 + $0x8] sm:$0xf]
  %v63 = vlaneseq
  %v64 = vand.u32 %v63, 127
  %vm65 = vcmp.lt.s32.totalorder %v64, 14
  %v67 = vunpack.c.l.b16 %v58
  %v68 = vunpack.c.h.b16 %v58
  %v69 = vpack.c.b16 %v67, %v67
  %v70 = vpack.c.b16 %v68, %v68
  %71 = vrot.lane.b32.xlu0 %v69, 127
  %v72 = vpop.permute.xlu0 %71
  %73 = vrot.lane.b32.xlu0 %v70, 127
  %v74 = vpop.permute.xlu0 %73
  %vm75 = vcmask 1039360
  %v76 = vsel %vm75, %v72, %v74
  %vm77 = vcmask 31744
  %v79 = vsel %vm77, %v61, 0
  %vm81 = vcmask 1041408
  %v83 = vsel %vm81, %v76, 0
  %85 = vmatpush.bf16.msra.mxu0 0
  %86 = vmatpush.bf16.msra.mxu0 0
  %87 = vmatpush.bf16.msra.mxu0 0
  %88 = vmatpush.bf16.msra.mxu0 0
  %89 = vmatpush.bf16.msra.mxu0 0
  %90 = vmatpush.bf16.msra.mxu0 0
  %91 = vmatpush.bf16.msra.mxu0 0
  %92 = vmatpush.bf16.msra.mxu0 %v83
  %93 = vmatmul.bf16.gmra.mxu0 %v79
  %v94 = vpop.f32.mrf.mxu0
  %v95 = vadd.f32 0.0, %v94
  %v96 = vpop.f32.mrf.mxu0
  %97 = vdwg.mxu0
  %v99 = vsel %vm77, %v60, 0
  %v102 = vsel %vm81, %v58, 0
  %104 = vmatpush.bf16.msra.mxu0 0
  %105 = vmatpush.bf16.msra.mxu0 0
  %106 = vmatpush.bf16.msra.mxu0 0
  %107 = vmatpush.bf16.msra.mxu0 0
  %108 = vmatpush.bf16.msra.mxu0 0
  %109 = vmatpush.bf16.msra.mxu0 0
  %110 = vmatpush.bf16.msra.mxu0 0
  %111 = vmatpush.bf16.msra.mxu0 %v102
  %112 = vmatmul.bf16.gmra.mxu0 %v99
  %v113 = vpop.f32.mrf.mxu0
  %v114 = vadd.f32 %v95, %v113
  %v115 = vpop.f32.mrf.mxu0
  %116 = vdwg.mxu0
  %117 = vrot.lane.b32.xlu0 %v69, 126
  %v118 = vpop.permute.xlu0 %117
  %119 = vrot.lane.b32.xlu0 %v70, 126
  %v120 = vpop.permute.xlu0 %119
  %vm121 = vcmask 1031168
  %v122 = vsel %vm121, %v118, %v120
  %v124 = vsel %vm77, %v62, 0
  %v127 = vsel %vm81, %v122, 0
  %129 = vmatpush.bf16.msra.mxu0 0
  %130 = vmatpush.bf16.msra.mxu0 0
  %131 = vmatpush.bf16.msra.mxu0 0
  %132 = vmatpush.bf16.msra.mxu0 0
  %133 = vmatpush.bf16.msra.mxu0 0
  %134 = vmatpush.bf16.msra.mxu0 0
  %135 = vmatpush.bf16.msra.mxu0 0
  %136 = vmatpush.bf16.msra.mxu0 %v127
  %137 = vmatmul.bf16.gmra.mxu0 %v124
  %v138 = vpop.f32.mrf.mxu0
  %v139 = vadd.f32 0.0, %v138
  %v140 = vpop.f32.mrf.mxu0
  %141 = vdwg.mxu0
  %v142 = vadd.f32 %v114, %v139
  %v143 = vsel %vm65, %v142, 0.0
  %144 = vadd.xlane.f32.xlu0 %v143
  %v145 = vpop.xlane.xlu0 %144
  %v146 = vadd.f32 %v145, 0.0
  %v147 = vmul.f32 %v143, %v143
  %148 = vadd.xlane.f32.xlu0 %v147
  %v149 = vpop.xlane.xlu0 %148
  %v150 = vadd.f32 %v149, 0.0
  %v152 = vunpack.c.l.b16 %v59
  %v153 = vunpack.c.h.b16 %v59
  %v154 = vpack.c.b16 %v152, %v152
  %v155 = vpack.c.b16 %v153, %v153
  %156 = vrot.lane.b32.xlu0 %v154, 127
  %v157 = vpop.permute.xlu0 %156
  %158 = vrot.lane.b32.xlu0 %v155, 127
  %v159 = vpop.permute.xlu0 %158
  %v160 = vsel %vm75, %v157, %v159
  %v162 = vsel %vm81, %v160, 0
  %164 = vmatpush.bf16.msra.mxu0 0
  %165 = vmatpush.bf16.msra.mxu0 0
  %166 = vmatpush.bf16.msra.mxu0 0
  %167 = vmatpush.bf16.msra.mxu0 0
  %168 = vmatpush.bf16.msra.mxu0 0
  %169 = vmatpush.bf16.msra.mxu0 0
  %170 = vmatpush.bf16.msra.mxu0 0
  %171 = vmatpush.bf16.msra.mxu0 %v162
  %172 = vmatmul.bf16.gmra.mxu0 %v79
  %v173 = vpop.f32.mrf.mxu0
  %v174 = vadd.f32 0.0, %v173
  %v175 = vpop.f32.mrf.mxu0
  %176 = vdwg.mxu0
  %v178 = vsel %vm81, %v59, 0
  %180 = vmatpush.bf16.msra.mxu0 0
  %181 = vmatpush.bf16.msra.mxu0 0
  %182 = vmatpush.bf16.msra.mxu0 0
  %183 = vmatpush.bf16.msra.mxu0 0
  %184 = vmatpush.bf16.msra.mxu0 0
  %185 = vmatpush.bf16.msra.mxu0 0
  %186 = vmatpush.bf16.msra.mxu0 0
  %187 = vmatpush.bf16.msra.mxu0 %v178
  %188 = vmatmul.bf16.gmra.mxu0 %v99
  %v189 = vpop.f32.mrf.mxu0
  %v190 = vadd.f32 %v174, %v189
  %v191 = vpop.f32.mrf.mxu0
  %192 = vdwg.mxu0
  %193 = vrot.lane.b32.xlu0 %v154, 126
  %v194 = vpop.permute.xlu0 %193
  %195 = vrot.lane.b32.xlu0 %v155, 126
  %v196 = vpop.permute.xlu0 %195
  %v197 = vsel %vm121, %v194, %v196
  %v199 = vsel %vm81, %v197, 0
  %201 = vmatpush.bf16.msra.mxu0 0
  %202 = vmatpush.bf16.msra.mxu0 0
  %203 = vmatpush.bf16.msra.mxu0 0
  %204 = vmatpush.bf16.msra.mxu0 0
  %205 = vmatpush.bf16.msra.mxu0 0
  %206 = vmatpush.bf16.msra.mxu0 0
  %207 = vmatpush.bf16.msra.mxu0 0
  %208 = vmatpush.bf16.msra.mxu0 %v199
  %209 = vmatmul.bf16.gmra.mxu0 %v124
  %v210 = vpop.f32.mrf.mxu0
  %v211 = vadd.f32 0.0, %v210
  %v212 = vpop.f32.mrf.mxu0
  %213 = vdwg.mxu0
  %v214 = vadd.f32 %v190, %v211
  %v215 = vsel %vm65, %v214, 0.0
  %216 = vadd.xlane.f32.xlu0 %v215
  %v217 = vpop.xlane.xlu0 %216
  %v218 = vadd.f32 %v146, %v217
  %v219 = vmul.f32 %v215, %v215
  %220 = vadd.xlane.f32.xlu0 %v219
  %v221 = vpop.xlane.xlu0 %220
  %v222 = vadd.f32 %v150, %v221
  %v223 = vld [vmem:[%s2] sm:$0xff]
  %vm224 = vcmask 7168
  %v225 = vsel %vm224, %v218, %v222
  %v226 = vadd.f32 %v223, %v225
  %vm227 = vcmask 15360
  %228 = vst.msk [vmem:[%s2] sm:$0xff] %vm227, %v226
  // Predicated region
  $region14: #{conv_bn_relu_1d.2} parent=0 // pred_check
    _
  $region15: #{conv_bn_relu_1d.2} parent=0 // pred_check_branch
    %230 = sbr.rel (0) target = $region17
  $region16: #{conv_bn_relu_1d.2} parent=0 // pred_region
    _
  $region17: #{conv_bn_relu_1d.2} parent=0 // pred_fallthru
    _
  // Predicated region
  $region18: #{conv_bn_relu_1d.2} parent=0 // pred_check
    _
  $region19: #{conv_bn_relu_1d.2} parent=0 // pred_check_branch
    %232 = sbr.rel (0) target = $region21
  $region20: #{conv_bn_relu_1d.2} parent=0 // pred_region
    _
  $region21: #{conv_bn_relu_1d.2} parent=0 // pred_fallthru
    _

// kernel: conv_bn_relu_1d.3
$region0: #{conv_bn_relu_1d.3}
  #allocation0 [shape = 'u32[]', space=smem, size = 0x4, offset = 0x4, fixed_abs, tag = 'smem constant byte address 0x4 - core index']
  #allocation1 [shape = 'u32[72,128]{1,0:T(1,128)}', space=vmem, size = 0x9000, scoped, tag = 'internal scratch']
  %s0 = inlined_call_operand.vmem [shape: f32[2,4,130], index: 0, kind: input, shape index: {}]
  %s1 = inlined_call_operand.vmem [shape: bf16[3,8,4], index: 1, kind: input, shape index: {}]
  %s2 = inlined_call_operand.vmem [shape: f32[8,1], index: 2, kind: input, shape index: {}]
  %s3 = inlined_call_operand.vmem [shape: f32[8,1], index: 3, kind: input, shape index: {}]
  %s4 = inlined_call_operand.hbm [shape: f32[2,8,128], index: 4, kind: output, shape index: {}]
  %s5 = sld [smem:[#allocation0]]
  $region26: #{conv_bn_relu_1d.3} parent=0
    _
  %s7 = ssub.s32 1, %s5
  %s8 = scalar_select 0, %s7, %s5
  $region1: #{conv_bn_relu_1d.3} parent=0
    #allocation2 [shape = 'u8[8192]{0}', space=vmem, size = 0x2000, scoped, tag = 'output window, operand 0, single buffered']
    #allocation3 [shape = 's32[1]{0}', space=sflag, size = 0x4, scoped, tag = 'scoped memory for conv_bn_relu_1d.3']
    %9 = vsyncpa [#allocation3], 0
    // Predicated region
    $region2: #{conv_bn_relu_1d.3} parent=1 // pred_check
      _
    $region3: #{conv_bn_relu_1d.3} parent=1 // pred_check_branch
      %11 = sbr.rel (0) target = $region5
    $region4: #{conv_bn_relu_1d.3} parent=1 // pred_region
      _
    $region5: #{conv_bn_relu_1d.3} parent=1 // pred_fallthru
      _
    // Predicated region
    $region6: #{conv_bn_relu_1d.3} parent=1 // pred_check
      _
    $region7: #{conv_bn_relu_1d.3} parent=1 // pred_check_branch
      %13 = sbr.rel (0) target = $region9
    $region8: #{conv_bn_relu_1d.3} parent=1 // pred_region
      _
    $region9: #{conv_bn_relu_1d.3} parent=1 // pred_fallthru
      _
    // Predicated region
    $region10: #{conv_bn_relu_1d.3} parent=1 // pred_check
      _
    $region11: #{conv_bn_relu_1d.3} parent=1 // pred_check_branch
      %15 = sbr.rel (0) target = $region13
    $region12: #{conv_bn_relu_1d.3} parent=1 // pred_region
      _
    $region13: #{conv_bn_relu_1d.3} parent=1 // pred_fallthru
      _
    // Predicated region
    $region14: #{conv_bn_relu_1d.3} parent=1 // pred_check
      _
    $region15: #{conv_bn_relu_1d.3} parent=1 // pred_check_branch
      %17 = sbr.rel (0) target = $region17
    $region16: #{conv_bn_relu_1d.3} parent=1 // pred_region
      _
    $region17: #{conv_bn_relu_1d.3} parent=1 // pred_fallthru
      _
    %v19 = vld [vmem:[%s0] sm:$0xff]
    %v20 = vld [vmem:[%s0 + $0x8] sm:$0xff]
    %23 = vst [vmem:[#allocation1] ss:$2 sm:$0xff] %v19
    %v24 = vld.sshfl [vmem:[#allocation1] sm:$0xff pattern:$0x75316420]
    %v25 = vld.sshfl [vmem:[#allocation1 + $0x8] sm:$0xff pattern:$0x75316420]
    %s26 = scalar_lea.vmem [#allocation1], 16
    %27 = vst [vmem:[%s26] ss:$2 sm:$0xff] %v20
    %v28 = vld.sshfl [vmem:[#allocation1 + $0x10] sm:$0xff pattern:$0x75316420]
    %v29 = vld.sshfl [vmem:[#allocation1 + $0x18] sm:$0xff pattern:$0x75316420]
    %v34 = vpack.c.bf16 %v25, %v24
    %v35 = vpack.c.bf16 %v29, %v28
    %v36 = vld [vmem:[%s1] sm:$0xf]
    %v37 = vld [vmem:[%s1 + $0x4] sm:$0xf]
    %v38 = vld [vmem:[%s1 + $0x8] sm:$0xf]
    %v39 = vld [vmem:[%s2] sm:$0xff]
    %v40 = vld [vmem:[%s3] sm:$0xff]
    %v42 = vunpack.c.l.b16 %v34
    %v43 = vunpack.c.h.b16 %v34
    %v44 = vpack.c.b16 %v42, %v42
    %v45 = vpack.c.b16 %v43, %v43
    %46 = vrot.lane.b32.xlu0 %v44, 127
    %v47 = vpop.permute.xlu0 %46
    %48 = vrot.lane.b32.xlu0 %v45, 127
    %v49 = vpop.permute.xlu0 %48
    %vm50 = vcmask 1039360
    %v51 = vsel %vm50, %v47, %v49
    %vm52 = vcmask 31744
    %v54 = vsel %vm52, %v37, 0
    %vm56 = vcmask 1041408
    %v58 = vsel %vm56, %v51, 0
    %60 = vmatpush.bf16.msra.mxu0 0
    %61 = vmatpush.bf16.msra.mxu0 0
    %62 = vmatpush.bf16.msra.mxu0 0
    %63 = vmatpush.bf16.msra.mxu0 0
    %64 = vmatpush.bf16.msra.mxu0 0
    %65 = vmatpush.bf16.msra.mxu0 0
    %66 = vmatpush.bf16.msra.mxu0 0
    %67 = vmatpush.bf16.msra.mxu0 %v58
    %68 = vmatmul.bf16.gmra.mxu0 %v54
    %v69 = vpop.f32.mrf.mxu0
    %v70 = vadd.f32 0.0, %v69
    %v71 = vpop.f32.mrf.mxu0
    %72 = vdwg.mxu0
    %v74 = vsel %vm52, %v36, 0
    %v77 = vsel %vm56, %v34, 0
    %79 = vmatpush.bf16.msra.mxu0 0
    %80 = vmatpush.bf16.msra.mxu0 0
    %81 = vmatpush.bf16.msra.mxu0 0
    %82 = vmatpush.bf16.msra.mxu0 0
    %83 = vmatpush.bf16.msra.mxu0 0
    %84 = vmatpush.bf16.msra.mxu0 0
    %85 = vmatpush.bf16.msra.mxu0 0
    %86 = vmatpush.bf16.msra.mxu0 %v77
    %87 = vmatmul.bf16.gmra.mxu0 %v74
    %v88 = vpop.f32.mrf.mxu0
    %v89 = vadd.f32 %v70, %v88
    %v90 = vpop.f32.mrf.mxu0
    %91 = vdwg.mxu0
    %92 = vrot.lane.b32.xlu0 %v44, 126
    %v93 = vpop.permute.xlu0 %92
    %94 = vrot.lane.b32.xlu0 %v45, 126
    %v95 = vpop.permute.xlu0 %94
    %vm96 = vcmask 1031168
    %v97 = vsel %vm96, %v93, %v95
    %v99 = vsel %vm52, %v38, 0
    %v102 = vsel %vm56, %v97, 0
    %104 = vmatpush.bf16.msra.mxu0 0
    %105 = vmatpush.bf16.msra.mxu0 0
    %106 = vmatpush.bf16.msra.mxu0 0
    %107 = vmatpush.bf16.msra.mxu0 0
    %108 = vmatpush.bf16.msra.mxu0 0
    %109 = vmatpush.bf16.msra.mxu0 0
    %110 = vmatpush.bf16.msra.mxu0 0
    %111 = vmatpush.bf16.msra.mxu0 %v102
    %112 = vmatmul.bf16.gmra.mxu0 %v99
    %v113 = vpop.f32.mrf.mxu0
    %v114 = vadd.f32 0.0, %v113
    %v115 = vpop.f32.mrf.mxu0
    %116 = vdwg.mxu0
    %v117 = vadd.f32 %v89, %v114
    %119 = vset.pattern.permute.xlu0 0
    %120 = vperm.xlu0 %119, %v39
    %v121 = vpop.permute.xlu0 %120
    %v123 = vmul.f32 %v117, %v121
    %125 = vset.pattern.permute.xlu0 0
    %126 = vperm.xlu0 %125, %v40
    %v127 = vpop.permute.xlu0 %126
    %v129 = vadd.f32 %v123, %v127
    %v130 = vmax.f32 %v129, 0.0
    %131 = vst [vmem:[#allocation2] sm:$0xff] %v130
    %v133 = vunpack.c.l.b16 %v35
    %v134 = vunpack.c.h.b16 %v35
    %v135 = vpack.c.b16 %v133, %v133
    %v136 = vpack.c.b16 %v134, %v134
    %137 = vrot.lane.b32.xlu0 %v135, 127
    %v138 = vpop.permute.xlu0 %137
    %139 = vrot.lane.b32.xlu0 %v136, 127
    %v140 = vpop.permute.xlu0 %139
    %v141 = vsel %vm50, %v138, %v140
    %v143 = vsel %vm56, %v141, 0
    %145 = vmatpush.bf16.msra.mxu0 0
    %146 = vmatpush.bf16.msra.mxu0 0
    %147 = vmatpush.bf16.msra.mxu0 0
    %148 = vmatpush.bf16.msra.mxu0 0
    %149 = vmatpush.bf16.msra.mxu0 0
    %150 = vmatpush.bf16.msra.mxu0 0
    %151 = vmatpush.bf16.msra.mxu0 0
    %152 = vmatpush.bf16.msra.mxu0 %v143
    %153 = vmatmul.bf16.gmra.mxu0 %v54
    %v154 = vpop.f32.mrf.mxu0
    %v155 = vadd.f32 0.0, %v154
    %v156 = vpop.f32.mrf.mxu0
    %157 = vdwg.mxu0
    %v159 = vsel %vm56, %v35, 0
    %161 = vmatpush.bf16.msra.mxu0 0
    %162 = vmatpush.bf16.msra.mxu0 0
    %163 = vmatpush.bf16.msra.mxu0 0
    %164 = vmatpush.bf16.msra.mxu0 0
    %165 = vmatpush.bf16.msra.mxu0 0
    %166 = vmatpush.bf16.msra.mxu0 0
    %167 = vmatpush.bf16.msra.mxu0 0
    %168 = vmatpush.bf16.msra.mxu0 %v159
    %169 = vmatmul.bf16.gmra.mxu0 %v74
    %v170 = vpop.f32.mrf.mxu0
    %v171 = vadd.f32 %v155, %v170
    %v172 = vpop.f32.mrf.mxu0
    %173 = vdwg.mxu0
    %174 = vrot.lane.b32.xlu0 %v135, 126
    %v175 = vpop.permute.xlu0 %174
    %176 = vrot.lane.b32.xlu0 %v136, 126
    %v177 = vpop.permute.xlu0 %176
    %v178 = vsel %vm96, %v175, %v177
    %v180 = vsel %vm56, %v178, 0
    %182 = vmatpush.bf16.msra.mxu0 0
    %183 = vmatpush.bf16.msra.mxu0 0
    %184 = vmatpush.bf16.msra.mxu0 0
    %185 = vmatpush.bf16.msra.mxu0 0
    %186 = vmatpush.bf16.msra.mxu0 0
    %187 = vmatpush.bf16.msra.mxu0 0
    %188 = vmatpush.bf16.msra.mxu0 0
    %189 = vmatpush.bf16.msra.mxu0 %v180
    %190 = vmatmul.bf16.gmra.mxu0 %v99
    %v191 = vpop.f32.mrf.mxu0
    %v192 = vadd.f32 0.0, %v191
    %v193 = vpop.f32.mrf.mxu0
    %194 = vdwg.mxu0
    %v195 = vadd.f32 %v171, %v192
    %v196 = vmul.f32 %v195, %v121
    %v197 = vadd.f32 %v196, %v127
    %v198 = vmax.f32 %v197, 0.0
    %s199 = scalar_lea.vmem [#allocation2], 8
    %200 = vst [vmem:[%s199] sm:$0xff] %v198
    // Predicated region
    $region18: #{conv_bn_relu_1d.3} parent=1 // pred_check
      _
    $region19: #{conv_bn_relu_1d.3} parent=1 // pred_check_branch
      %202 = sbr.rel (0) target = $region21
    $region20: #{conv_bn_relu_1d.3} parent=1 // pred_region
      %204 = vsyncadd [#allocation3], 0
      %s205 = sshll.u32 [#allocation2], 4
      %s206 = int_to_ptr.vmem [resolvable:$true] %s205
      %s207 = sshll.u32 %s4, 4
      %s208 = int_to_ptr.hbm [resolvable:$true] %s207
      %213 = dma.vmem_to_hbm [thread:$0]  %s206, 256, %s208, [#allocation3], 128, 128, 8
    $region21: #{conv_bn_relu_1d.3} parent=1 // pred_fallthru
      _
    // Predicated region
    $region22: #{conv_bn_relu_1d.3} parent=1 // pred_check
      _
    $region23: #{conv_bn_relu_1d.3} parent=1 // pred_check_branch
      %215 = sbr.rel (0) target = $region25
    $region24: #{conv_bn_relu_1d.3} parent=1 // pred_region
      %217 = dma.done [#allocation3], 256
    $region25: #{conv_bn_relu_1d.3} parent=1 // pred_fallthru
      _
    %218 = vsyncpa [#allocation3], 1

</llo_original>
